<compile_context>
chip_gen: v5e
topology: v5e:2x2
jax: 0.10.0
libtpu: 0.0.40
codegen_flags: <defaults>
</compile_context>

<pallas_src>
from functools import partial

import jax
import jax.numpy as jnp
from jax import lax
from jax.experimental import pallas as pl
from jax.experimental.pallas import tpu as pltpu

LANE = 128  # lane width; S-tiles are multiples of this (dense, unmasked vst)


def _layernorm_kernel(eps, single_pass, x_ref, g_ref, o_ref):
    # x_ref / o_ref: (1, C, ts)   (C on sublanes, spatial tile on lanes)
    # g_ref:         (1, C, 1)    (per-channel scale, lane-broadcast)
    x = x_ref[...].astype(jnp.float32)
    mean = jnp.mean(x, axis=1, keepdims=True)                  # (1, 1, ts)
    if single_pass:
        # Fused one-pass statistics (bf16 path): fewer block traversals / VPU
        # ops so the kernel stays HBM-bound on v7x; f32 accumulation + clamp.
        mean_sq = jnp.mean(x * x, axis=1, keepdims=True)
        var = jnp.maximum(mean_sq - mean * mean, 0.0)
    else:
        # Two-pass (f32 path): numerically identical to the PyTorch reference.
        xc = x - mean
        var = jnp.mean(xc * xc, axis=1, keepdims=True)         # unbiased=False
    inv = lax.rsqrt(var + eps)                                 # EUP slot
    g = g_ref[...].astype(jnp.float32)                         # (1, C, 1)
    o_ref[...] = ((x - mean) * inv * g).astype(o_ref.dtype)


def layer_norm_nchw(x, g):
    """x: (N, C, H, W); g: (1, C, 1, 1).  Returns same shape/dtype as x."""
    eps = 1e-05 if x.dtype == jnp.float32 else 1e-03
    single_pass = x.dtype != jnp.float32
    N, C, H, W = x.shape
    S = H * W

    # Metadata-only views: no extra HBM passes regardless of S.
    x3 = x.reshape(N, C, S)
    g3 = g.reshape(1, C, 1)

    dtype_bytes = jnp.dtype(x.dtype).itemsize

    # --- generation-aware VMEM budget ---------------------------------------
    try:
        vmem_cap = int(getattr(pltpu.get_tpu_info(), "vmem_capacity_bytes",
                               128 * 1024 * 1024))
    except Exception:  # pragma: no cover - conservative fallback
        vmem_cap = 128 * 1024 * 1024
    is_small_vmem = vmem_cap < 96 * 1024 * 1024            # v7x-class (64 MiB/TC)
    target_block_bytes = (4 if is_small_vmem else 8) * 1024 * 1024
    base_vmem_limit = (48 if is_small_vmem else 64) * 1024 * 1024
    min_steps = 8 if is_small_vmem else 4                   # megacore needs >=4/TC

    # --- spatial (lane-axis) tile size ---------------------------------------
    if S <= LANE:
        ts = S                                              # full extent is legal
    else:
        s_cover = pl.cdiv(S, LANE) * LANE
        bytes_per_col = max(1, C * dtype_bytes)
        ts = max(LANE, (target_block_bytes // bytes_per_col) // LANE * LANE)
        ts = min(ts, s_cover)
        # Keep enough grid steps for DMA/compute overlap + both v7x TCs busy.
        while ts > LANE and N * pl.cdiv(S, ts) < min_steps:
            ts = max(LANE, ((ts // 2) // LANE) * LANE)
    grid = (N, pl.cdiv(S, ts))                              # partial tail is masked

    # vmem_limit consistent with the actual block (covers huge-C edge cases):
    # 2x double-buffered in + out blocks, f32 temporaries, small headroom.
    block_bytes = C * ts * dtype_bytes
    f32_block = C * ts * 4
    needed = 4 * block_bytes + 2 * f32_block + 2 * 1024 * 1024
    vmem_limit = min(int(0.75 * vmem_cap), max(base_vmem_limit, needed))

    out3 = pl.pallas_call(
        partial(_layernorm_kernel, eps, single_pass),
        out_shape=jax.ShapeDtypeStruct((N, C, S), x.dtype),
        grid_spec=pltpu.PrefetchScalarGridSpec(
            num_scalar_prefetch=0,
            grid=grid,
            in_specs=[
                pl.BlockSpec((1, C, ts), lambda n, j: (n, 0, j)),
                pl.BlockSpec((1, C, 1), lambda n, j: (0, 0, 0)),
            ],
            out_specs=pl.BlockSpec((1, C, ts), lambda n, j: (n, 0, j)),
        ),
        compiler_params=pltpu.CompilerParams(
            # Both axes independent -> megacore sharding on v7x; neutral elsewhere.
            dimension_semantics=("parallel", "parallel"),
            vmem_limit_bytes=vmem_limit,
        ),
    )(x3, g3)

    return out3.reshape(N, C, H, W)


def _layer_norm_ref(x, g, eps):
    mean = jnp.mean(x, axis=1, keepdims=True)
    var = jnp.mean((x - mean) ** 2, axis=1, keepdims=True)
    return (x - mean) * lax.rsqrt(var + eps) * g


if __name__ == "__main__":
    key = jax.random.PRNGKey(0)
    k1, k2 = jax.random.split(key)

    # Case 1: spatial size a multiple of 128 (S = 256), f32.
    N, C, H, W = 2, 4, 16, 16
    x = jax.random.normal(k1, (N, C, H, W), dtype=jnp.float32)
    g = jnp.ones((1, C, 1, 1), dtype=jnp.float32)   # matches torch.ones(1, C, 1, 1)
    out = jax.block_until_ready(layer_norm_nchw(x, g))
    ref = _layer_norm_ref(x, g, 1e-05)
    assert out.shape == (N, C, H, W) and out.dtype == x.dtype
    assert jnp.allclose(out, ref, atol=1e-5, rtol=1e-5)

    # Case 2: ragged spatial size (S = 196, not a multiple of 128), f32.
    # Exercises the in-kernel masked tail — no pad / slice passes in the wrapper.
    N2, C2, H2, W2 = 1, 8, 14, 14
    x2 = jax.random.normal(k2, (N2, C2, H2, W2), dtype=jnp.float32)
    g2 = jnp.ones((1, C2, 1, 1), dtype=jnp.float32)
    out2 = jax.block_until_ready(layer_norm_nchw(x2, g2))
    ref2 = _layer_norm_ref(x2, g2, 1e-05)
    assert jnp.allclose(out2, ref2, atol=1e-5, rtol=1e-5)

    # Case 3: bf16 input (eps = 1e-3, single-pass fused statistics path).
    xb = x2.astype(jnp.bfloat16)
    gb = g2.astype(jnp.bfloat16)
    outb = jax.block_until_ready(layer_norm_nchw(xb, gb))
    refb = _layer_norm_ref(xb.astype(jnp.float32), gb.astype(jnp.float32), 1e-03)
    assert outb.dtype == jnp.bfloat16
    assert jnp.allclose(outb.astype(jnp.float32), refb, atol=2e-2, rtol=2e-2)

    print("KERNEL_OK")
</pallas_src>

<mosaic_0001>
module attributes {stable_mosaic.version = 11 : i64} {
  func.func @_layernorm_kernel(%arg0: i32, %arg1: i32, %arg2: memref<1x4x128xf32, #tpu.memory_space<vmem>>, %arg3: memref<1x4x1xf32, #tpu.memory_space<vmem>>, %arg4: memref<1x4x128xf32, #tpu.memory_space<vmem>>) attributes {dimension_semantics = [#tpu.dimension_semantics<parallel>, #tpu.dimension_semantics<parallel>], iteration_bounds = array<i64: 2, 2>, scalar_prefetch = 0 : i64, scratch_operands = 0 : i64, tpu.core_type = #tpu.core_type<tc>, window_params = [{transform_indices = @transform_0, window_bounds = array<i64: 1, 4, 128>}, {pipeline_mode = #tpu.pipeline_mode<synchronous>, transform_indices = @transform_1, window_bounds = array<i64: 1, 4, 1>}, {transform_indices = @transform_2, window_bounds = array<i64: 1, 4, 128>}]} {
    %c0 = arith.constant 0 : index
    %c0_0 = arith.constant 0 : index
    %c0_1 = arith.constant 0 : index
    %0 = vector.load %arg2[%c0, %c0_0, %c0_1] : memref<1x4x128xf32, #tpu.memory_space<vmem>>, vector<1x4x128xf32>
    %cst = arith.constant dense<0.000000e+00> : vector<1x128xf32>
    %1 = vector.multi_reduction <add>, %0, %cst [1] : vector<1x4x128xf32> to vector<1x128xf32>
    %2 = vector.shape_cast %1 : vector<1x128xf32> to vector<1x1x128xf32>
    %cst_2 = arith.constant 4.000000e+00 : f32
    %3 = vector.broadcast %cst_2 : f32 to vector<1x1x128xf32>
    %4 = arith.divf %2, %3 : vector<1x1x128xf32>
    %5 = vector.broadcast %4 : vector<1x1x128xf32> to vector<1x4x128xf32>
    %6 = arith.subf %0, %5 : vector<1x4x128xf32>
    %7 = arith.mulf %6, %6 : vector<1x4x128xf32>
    %cst_3 = arith.constant dense<0.000000e+00> : vector<1x128xf32>
    %8 = vector.multi_reduction <add>, %7, %cst_3 [1] : vector<1x4x128xf32> to vector<1x128xf32>
    %9 = vector.shape_cast %8 : vector<1x128xf32> to vector<1x1x128xf32>
    %cst_4 = arith.constant 4.000000e+00 : f32
    %10 = vector.broadcast %cst_4 : f32 to vector<1x1x128xf32>
    %11 = arith.divf %9, %10 : vector<1x1x128xf32>
    %cst_5 = arith.constant 9.99999974E-6 : f32
    %12 = vector.broadcast %cst_5 : f32 to vector<1x1x128xf32>
    %13 = arith.addf %11, %12 : vector<1x1x128xf32>
    %14 = math.rsqrt %13 : vector<1x1x128xf32>
    %c0_6 = arith.constant 0 : index
    %c0_7 = arith.constant 0 : index
    %c0_8 = arith.constant 0 : index
    %15 = vector.load %arg3[%c0_6, %c0_7, %c0_8] : memref<1x4x1xf32, #tpu.memory_space<vmem>>, vector<1x4x1xf32>
    %16 = vector.broadcast %4 : vector<1x1x128xf32> to vector<1x4x128xf32>
    %17 = arith.subf %0, %16 : vector<1x4x128xf32>
    %18 = vector.broadcast %14 : vector<1x1x128xf32> to vector<1x4x128xf32>
    %19 = arith.mulf %17, %18 : vector<1x4x128xf32>
    %20 = vector.broadcast %15 : vector<1x4x1xf32> to vector<1x4x128xf32>
    %21 = arith.mulf %19, %20 : vector<1x4x128xf32>
    %c0_9 = arith.constant 0 : index
    %c0_10 = arith.constant 0 : index
    %c0_11 = arith.constant 0 : index
    %22 = vector.load %arg4[%c0_9, %c0_10, %c0_11] : memref<1x4x128xf32, #tpu.memory_space<vmem>>, vector<1x4x128xf32>
    tpu.vector_store %arg4[%c0_9, %c0_10, %c0_11], %21 {strides = array<i32>} : memref<1x4x128xf32, #tpu.memory_space<vmem>>, vector<1x4x128xf32>,
    return
  }
  func.func @transform_0(%arg0: i32, %arg1: i32) -> (i32, i32, i32) {
    %c0_i32 = arith.constant 0 : i32
    %c0_i32_0 = arith.constant 0 : i32
    return %arg0, %c0_i32, %arg1 : i32, i32, i32
  }
  func.func @transform_1(%arg0: i32, %arg1: i32) -> (i32, i32, i32) {
    %c0_i32 = arith.constant 0 : i32
    %c0_i32_0 = arith.constant 0 : i32
    %c0_i32_1 = arith.constant 0 : i32
    %c0_i32_2 = arith.constant 0 : i32
    return %c0_i32, %c0_i32_0, %c0_i32_1 : i32, i32, i32
  }
  func.func @transform_2(%arg0: i32, %arg1: i32) -> (i32, i32, i32) {
    %c0_i32 = arith.constant 0 : i32
    %c0_i32_0 = arith.constant 0 : i32
    return %arg0, %c0_i32, %arg1 : i32, i32, i32
  }
}

</mosaic_0001>

<llo_original>
// kernel: tpu_custom_call.1
$region0: #{tpu_custom_call.1}
  #allocation0 [shape = 'u32[]', space=smem, size = 0x4, offset = 0x4, fixed_abs, tag = 'smem constant byte address 0x4 - core index']
  #allocation1 [shape = 'u32[72,128]{1,0:T(1,128)}', space=vmem, size = 0x9000, scoped, tag = 'internal scratch']
  %s0 = inlined_call_operand.hbm [shape: f32[2,4,256], index: 0, kind: input, shape index: {}]
  %s1 = inlined_call_operand.vmem [shape: f32[1,4,1], index: 1, kind: input, shape index: {}]
  %s2 = inlined_call_operand.hbm [shape: f32[2,4,256], index: 2, kind: output, shape index: {}]
  %s3 = sld [smem:[#allocation0]]
  $region45: #{tpu_custom_call.1} parent=0
    _
  %s5 = ssub.s32 1, %s3
  %s6 = scalar_select 0, %s5, %s3
  $region1: #{tpu_custom_call.1} parent=0
    #allocation2 [shape = 'u8[4096]{0}', space=vmem, size = 0x1000, scoped, tag = 'input window, operand 0']
    #allocation3 [shape = 's32[2]{0}', space=sflag, size = 0x8, scoped, tag = 'scoped memory for tpu_custom_call.1']
    #allocation4 [shape = 's32[2]{0}', space=sflag, size = 0x8, scoped, tag = 'scoped memory for tpu_custom_call.1']
    #allocation5 [shape = 'u8[4096]{0}', space=vmem, size = 0x1000, scoped, tag = 'output window, operand 0']
    %7 = vsyncpa [#allocation3], 0
    %s8 = scalar_lea.sflag [#allocation3], 1
    %9 = vsyncpa %s8, 0
    %10 = vsyncpa [#allocation4], 0
    %s11 = scalar_lea.sflag [#allocation4], 1
    %12 = vsyncpa %s11, 0
    loop: start=0, step=1, limit=6
    $region2: #{tpu_custom_call.1} parent=1 // loop_pre_header
      _
    $region3: #{tpu_custom_call.1} parent=1 // loop_header
      %s14 = sphi 0, %s18
      %p15 = scmp.ge.s32.totalorder %s14, 6
      %s21 = sphi 0, %s33
      %s22 = sphi 0, %s29
      %s23 = sphi 0, %s21
      %s24 = sphi 0, %s22
      %s25 = sphi 0, %s23
      %s26 = sphi 0, %s24
      %s38 = sphi 0, %s40
      %s41 = sphi 0, %s38
      %s42 = sphi 0, %s41
      %s58 = sphi 0, %s42
      %s62 = sphi 0, %s62
      %s64 = sphi 0, %s62
      %s65 = sphi 0, %s64
      %s79 = sphi 0, %s65
      %s87 = sphi 0, %s89
      %s90 = sphi 0, %s87
      %s91 = sphi 0, %s90
      %s107 = sphi 0, %s91
    $region4: #{tpu_custom_call.1} parent=1 // loop_header_branch
      %17 = sbr.rel (%p15) target = $region8
    $region5: #{tpu_custom_call.1} parent=1 // loop_body
      %s19 = ssub.s32 %s14, 1
      %s20 = ssub.s32 %s14, 2
      %s27 = sadd.s32 1, %s22
      %p28 = scmp.ge.s32.totalorder %s27, 2
      %s29 = scalar_select %p28, 0, %s27
      %s30 = sadd.s32 1, %s21
      %s31 = scalar_select %p28, %s30, %s21
      %p32 = scmp.ge.s32.totalorder %s31, 2
      %s33 = scalar_select %p32, 0, %s31
      %s34 = ssub.s32 %s21, %s33
      %s35 = ssub.s32 %s22, %s29
      %s36 = sor.u32 %s34, %s35
      %p37 = scmp.eq.s32.totalorder %s36, 0
      %s39 = sadd.s32 %s38, 1
      %s40 = scalar_select %p37, %s38, %s39
      %p43 = pneg %p37
      %p44 = scmp.eq.s32.totalorder %s14, 3
      %p45 = por %p43, %p44
      %p46 = scmp.ne.s32.totalorder %s38, %s41
      %p47 = scmp.eq.s32.totalorder %s14, 0
      %p48 = por %p46, %p47
      %p49 = scmp.ne.s32.totalorder %s38, %s41
      %p50 = scmp.eq.s32.totalorder %s19, 3
      %p51 = por %p49, %p50
      %p52 = scmp.ne.s32.totalorder %s41, %s42
      %p53 = scmp.eq.s32.totalorder %s19, 0
      %p54 = por %p52, %p53
      %p55 = scmp.ne.s32.totalorder %s41, %s42
      %p56 = scmp.eq.s32.totalorder %s20, 3
      %p57 = por %p55, %p56
      %p59 = scmp.ne.s32.totalorder %s42, %s58
      %p60 = scmp.eq.s32.totalorder %s20, 0
      %p61 = por %p59, %p60
      %s63 = sadd.s32 %s62, 1
      %p66 = scmp.eq.s32.totalorder %s14, 3
      %p67 = scmp.ne.s32.totalorder %s62, %s64
      %p68 = scmp.eq.s32.totalorder %s14, 0
      %p69 = por %p67, %p68
      %p70 = scmp.ne.s32.totalorder %s62, %s64
      %p71 = scmp.eq.s32.totalorder %s19, 3
      %p72 = por %p70, %p71
      %p73 = scmp.ne.s32.totalorder %s64, %s65
      %p74 = scmp.eq.s32.totalorder %s19, 0
      %p75 = por %p73, %p74
      %p76 = scmp.ne.s32.totalorder %s64, %s65
      %p77 = scmp.eq.s32.totalorder %s20, 3
      %p78 = por %p76, %p77
      %p80 = scmp.ne.s32.totalorder %s65, %s79
      %p81 = scmp.eq.s32.totalorder %s20, 0
      %p82 = por %p80, %p81
      %s83 = ssub.s32 %s21, %s33
      %s84 = ssub.s32 %s22, %s29
      %s85 = sor.u32 %s83, %s84
      %p86 = scmp.eq.s32.totalorder %s85, 0
      %s88 = sadd.s32 %s87, 1
      %s89 = scalar_select %p86, %s87, %s88
      %p92 = pneg %p86
      %p93 = scmp.eq.s32.totalorder %s14, 3
      %p94 = por %p92, %p93
      %p95 = scmp.ne.s32.totalorder %s87, %s90
      %p96 = scmp.eq.s32.totalorder %s14, 0
      %p97 = por %p95, %p96
      %p98 = scmp.ne.s32.totalorder %s87, %s90
      %p99 = scmp.eq.s32.totalorder %s19, 3
      %p100 = por %p98, %p99
      %p101 = scmp.ne.s32.totalorder %s90, %s91
      %p102 = scmp.eq.s32.totalorder %s19, 0
      %p103 = por %p101, %p102
      %p104 = scmp.ne.s32.totalorder %s90, %s91
      %p105 = scmp.eq.s32.totalorder %s20, 3
      %p106 = por %p104, %p105
      %p108 = scmp.ne.s32.totalorder %s91, %s107
      %p109 = scmp.eq.s32.totalorder %s20, 0
      %p110 = por %p108, %p109
      %p111 = scmp.le.s32.totalorder 1, %s14
      %p112 = scmp.lt.s32.totalorder %s14, 5
      %p113 = pnand %p111, %p112
      %p114 = pneg %p113
      // Predicated region
      $region9: #{tpu_custom_call.1} parent=5 // pred_check
        _
      $region10: #{tpu_custom_call.1} parent=5 // pred_check_branch
        %116 = sbr.rel (%p113) target = $region12
      $region11: #{tpu_custom_call.1} parent=5 // pred_region
        %s117 = ssub.s32 %s14, 1
        // Predicated region
        $region13: #{tpu_custom_call.1} parent=11 // pred_check
          %p118 = pneg %p75
        $region14: #{tpu_custom_call.1} parent=11 // pred_check_branch
          %120 = sbr.rel (%p118) target = $region16
        $region15: #{tpu_custom_call.1} parent=11 // pred_region
          _
        $region16: #{tpu_custom_call.1} parent=11 // pred_fallthru
          _
      $region12: #{tpu_custom_call.1} parent=5 // pred_fallthru
        _
      %p121 = scmp.lt.s32.totalorder %s14, 4
      // Predicated region
      $region17: #{tpu_custom_call.1} parent=5 // pred_check
        %p122 = pneg %p121
      $region18: #{tpu_custom_call.1} parent=5 // pred_check_branch
        %124 = sbr.rel (%p122) target = $region20
      $region19: #{tpu_custom_call.1} parent=5 // pred_region
        // Predicated region
        $region21: #{tpu_custom_call.1} parent=19 // pred_check
          %p125 = pneg %p48
        $region22: #{tpu_custom_call.1} parent=19 // pred_check_branch
          %127 = sbr.rel (%p125) target = $region24
        $region23: #{tpu_custom_call.1} parent=19 // pred_region
          %s128 = sand.u32 %s38, 1
          %s129 = scalar_lea.sflag [#allocation3], %s128
          %s130 = sand.u32 %s38, 1
          %s131 = smul.addr %s130, 4
          %s132 = scalar_lea.vmem [#allocation2], %s131
          %134 = vsyncadd %s129, 0
          %s135 = smul.addr %s21, 2
          %s136 = sadd.s32 %s22, %s135
          %s137 = smul.addr %s136, 4
          %s138 = scalar_lea.hbm %s0, %s137
          %s140 = sshll.u32 %s138, 4
          %s141 = int_to_ptr.hbm [resolvable:$true] %s140
          %s142 = sshll.u32 %s132, 4
          %s143 = int_to_ptr.vmem [resolvable:$true] %s142
          %145 = dma.hbm_to_vmem [thread:$0]  %s141, 64, %s143, %s129
        $region24: #{tpu_custom_call.1} parent=19 // pred_fallthru
          _
      $region20: #{tpu_custom_call.1} parent=5 // pred_fallthru
        _
      %p146 = scmp.le.s32.totalorder 1, %s14
      %p147 = scmp.lt.s32.totalorder %s14, 5
      %p148 = pnand %p146, %p147
      %p149 = pneg %p148
      // Predicated region
      $region25: #{tpu_custom_call.1} parent=5 // pred_check
        _
      $region26: #{tpu_custom_call.1} parent=5 // pred_check_branch
        %151 = sbr.rel (%p148) target = $region28
      $region27: #{tpu_custom_call.1} parent=5 // pred_region
        %s152 = ssub.s32 %s14, 1
        %s153 = sand.u32 %s41, 1
        %s154 = scalar_lea.sflag [#allocation3], %s153
        %s155 = sand.u32 %s41, 1
        %s156 = smul.addr %s155, 4
        %s157 = scalar_lea.vmem [#allocation2], %s156
        // Predicated region
        $region29: #{tpu_custom_call.1} parent=27 // pred_check
          %p158 = pneg %p54
        $region30: #{tpu_custom_call.1} parent=27 // pred_check_branch
          %160 = sbr.rel (%p158) target = $region32
        $region31: #{tpu_custom_call.1} parent=27 // pred_region
          %162 = dma.done %s154, 64
        $region32: #{tpu_custom_call.1} parent=27 // pred_fallthru
          _
        %s163 = sand.u32 %s41, 1
        %s164 = scalar_lea.sflag [#allocation3], %s163
        %s165 = sand.u32 %s41, 1
        %s166 = smul.addr %s165, 4
        %s167 = scalar_lea.vmem [#allocation2], %s166
        %p168 = pneg %p54
        %p169 = pneg %p51
        %p170 = pneg %p75
        %p171 = pneg %p72
        %p172 = pneg %p103
        %p173 = pneg %p100
        %s174 = sand.u32 %s90, 1
        %s175 = scalar_lea.sflag [#allocation4], %s174
        %s176 = sand.u32 %s90, 1
        %s177 = smul.addr %s176, 4
        %s178 = scalar_lea.vmem [#allocation5], %s177
        %v179 = vld [vmem:[%s157] sm:$0xf]
        %vm180 = vcmask 1043456
        %v181 = vsel %vm180, %v179, 0.0
        %v182 = vrot.slane %v181, 4
        %v183 = vadd.f32 %v181, %v182
        %v184 = vrot.slane %v183, 2
        %v185 = vadd.f32 %v183, %v184
        %v186 = vrot.slane %v185, 1
        %v187 = vadd.f32 %v185, %v186
        %v188 = vrcp.pop 4.0
        %v189 = vmul.f32 4.0, %v188
        %v190 = vsub.f32 1.0, %v189
        %v191 = vmul.f32 %v188, %v190
        %v192 = vadd.f32 %v188, %v191
        %vm193 = vweird.f32 %v188
        %v194 = vsel %vm193, %v188, %v192
        %v195 = vmul.f32 %v187, %v194
        %v196 = vsub.f32 %v179, %v195
        %v197 = vmul.f32 %v196, %v196
        %v198 = vsel %vm180, %v197, 0.0
        %v199 = vrot.slane %v198, 4
        %v200 = vadd.f32 %v198, %v199
        %v201 = vrot.slane %v200, 2
        %v202 = vadd.f32 %v200, %v201
        %v203 = vrot.slane %v202, 1
        %v204 = vadd.f32 %v202, %v203
        %v205 = vmul.f32 %v204, %v194
        %v206 = vadd.f32 %v205, 1e-05
        %v207 = vrsqrt.pop %v206
        %v208 = vmul.f32 %v207, %v206
        %v209 = vmul.f32 %v208, %v207
        %v210 = vmul.f32 0.5, %v209
        %v211 = vsub.f32 1.5, %v210
        %v212 = vmul.f32 %v207, %v211
        %vm213 = vweird.f32 %v206
        %vm214 = vweird.f32 %v207
        %vm215 = vmor %vm213, %vm214
        %v216 = vsel %vm215, %v207, %v212
        %v217 = vld [vmem:[%s1] sm:$0xf]
        %v218 = vmul.f32 %v196, %v216
        %220 = vset.pattern.permute.xlu0 0
        %221 = vperm.xlu0 %220, %v217
        %v222 = vpop.permute.xlu0 %221
        %v224 = vmul.f32 %v218, %v222
        %225 = vst [vmem:[%s178] sm:$0xf] %v224
        %s226 = sand.u32 %s90, 1
        %s227 = scalar_lea.sflag [#allocation4], %s226
        %s228 = sand.u32 %s90, 1
        %s229 = smul.addr %s228, 4
        %s230 = scalar_lea.vmem [#allocation5], %s229
        // Predicated region
        $region33: #{tpu_custom_call.1} parent=27 // pred_check
          %p231 = pneg %p100
        $region34: #{tpu_custom_call.1} parent=27 // pred_check_branch
          %233 = sbr.rel (%p231) target = $region36
        $region35: #{tpu_custom_call.1} parent=27 // pred_region
          %235 = vsyncadd %s227, 0
          %s236 = smul.addr %s23, 2
          %s237 = sadd.s32 %s24, %s236
          %s238 = smul.addr %s237, 4
          %s239 = scalar_lea.hbm %s2, %s238
          %s241 = sshll.u32 %s230, 4
          %s242 = int_to_ptr.vmem [resolvable:$true] %s241
          %s243 = sshll.u32 %s239, 4
          %s244 = int_to_ptr.hbm [resolvable:$true] %s243
          %246 = dma.vmem_to_hbm [thread:$0]  %s242, 64, %s244, %s227
        $region36: #{tpu_custom_call.1} parent=27 // pred_fallthru
          _
      $region28: #{tpu_custom_call.1} parent=5 // pred_fallthru
        _
      %p247 = scmp.le.s32.totalorder 2, %s14
      // Predicated region
      $region37: #{tpu_custom_call.1} parent=5 // pred_check
        %p248 = pneg %p247
      $region38: #{tpu_custom_call.1} parent=5 // pred_check_branch
        %250 = sbr.rel (%p248) target = $region40
      $region39: #{tpu_custom_call.1} parent=5 // pred_region
        %s251 = ssub.s32 %s14, 2
        // Predicated region
        $region41: #{tpu_custom_call.1} parent=39 // pred_check
          %p252 = pneg %p106
        $region42: #{tpu_custom_call.1} parent=39 // pred_check_branch
          %254 = sbr.rel (%p252) target = $region44
        $region43: #{tpu_custom_call.1} parent=39 // pred_region
          %s255 = sand.u32 %s91, 1
          %s256 = scalar_lea.sflag [#allocation4], %s255
          %s257 = sand.u32 %s91, 1
          %s258 = smul.addr %s257, 4
          %s259 = scalar_lea.vmem [#allocation5], %s258
          %261 = dma.done %s256, 64
        $region44: #{tpu_custom_call.1} parent=39 // pred_fallthru
          _
      $region40: #{tpu_custom_call.1} parent=5 // pred_fallthru
        _
    $region6: #{tpu_custom_call.1} parent=1 // loop_footer
      %s18 = sadd.s32 1, %s14
    $region7: #{tpu_custom_call.1} parent=1 // loop_footer_branch
      %13 = sbr.rel target = $region3
    $region8: #{tpu_custom_call.1} parent=1 // loop_exit
      _
    %262 = vsyncpa [#allocation3], 1
    %s263 = scalar_lea.sflag [#allocation3], 1
    %264 = vsyncpa %s263, 1
    %265 = vsyncpa [#allocation4], 1
    %s266 = scalar_lea.sflag [#allocation4], 1
    %267 = vsyncpa %s266, 1

</llo_original>
